<compile_context>
chip_gen: v6e
topology: v6e:2x2x1
jax: 0.10.0
libtpu: 0.0.40
codegen_flags: <defaults>
</compile_context>

<pallas_src>
import math
from functools import partial
from typing import List, Optional

import numpy as np
import jax
import jax.numpy as jnp
from jax.experimental import pallas as pl
from jax.experimental.pallas import tpu as pltpu


_VMEM_LIMIT_BYTES = 48 * 1024 * 1024   # safe on v5e/v6e (128 MiB) and v7x (64 MiB)
_MAX_LATERAL_TILE = 2048               # flattened-spatial tile for lateral-only kernel
_MAX_FUSED_ROWS = 8                    # output rows per grid step in fused kernel


# ----------------------------- Pallas kernels ------------------------------

def _lateral_kernel(x_ref, wt_ref, b_ref, o_ref, *, compute_dtype):
    """1x1 conv as a channel matmul in NCHW layout.
    x: (1, Cin, T)   wt: (D, Cin)   b: (D, 1)   ->   o: (1, D, T)"""
    x = x_ref[0].astype(compute_dtype)
    wt = wt_ref[...].astype(compute_dtype)
    acc = jnp.dot(wt, x, preferred_element_type=jnp.float32)
    o_ref[0] = (acc + b_ref[...]).astype(o_ref.dtype)


def _fused_kernel(x_ref, wt_ref, b_ref, prev_ref, mwt_ref, o_ref, *,
                  compute_dtype, fuse_scale, tile_h, w_out, hp):
    """Lateral 1x1 conv fused with separable x2-bilinear top-down upsample + add.
    x: (1, Cin, TILE_H*W)   wt: (D, Cin)   b: (D, 1)
    prev: (1, D, Hp, Wp)    (coarser level, VMEM-resident across row tiles)
    mwt: (Wp, W)            (horizontal x2 interpolation matrix, transposed)
    o: (1, D, TILE_H*W)"""
    t = pl.program_id(1)
    wt = wt_ref[...].astype(compute_dtype)
    bias = b_ref[...]
    mwt = mwt_ref[...].astype(compute_dtype)
    for r in range(tile_h):                 # static unroll over output rows
        h = t * tile_h + r                  # global output row index
        # lateral conv for this row: (D, Cin) @ (Cin, W) -> (D, W)
        xr = x_ref[0, :, pl.ds(r * w_out, w_out)].astype(compute_dtype)
        lat = jnp.dot(wt, xr, preferred_element_type=jnp.float32) + bias
        # vertical x2 bilinear (align_corners=False): 2-tap 0.25/0.75 blend.
        # Parity of h equals parity of r (tile_h is even), so taps are static.
        if r % 2 == 0:
            j0 = jnp.maximum(h // 2 - 1, 0)
            j1 = h // 2
            w0, w1 = 0.25, 0.75
        else:
            j0 = h // 2
            j1 = jnp.minimum(h // 2 + 1, hp - 1)
            w0, w1 = 0.75, 0.25
        row0 = prev_ref[0, :, pl.ds(j0, 1), :][:, 0, :]    # (D, Wp)
        row1 = prev_ref[0, :, pl.ds(j1, 1), :][:, 0, :]    # (D, Wp)
        crow = w0 * row0 + w1 * row1                       # f32 blend (VPU)
        # horizontal x2 bilinear via a small matmul: (D, Wp) @ (Wp, W)
        up = jnp.dot(crow.astype(compute_dtype), mwt,
                     preferred_element_type=jnp.float32)
        o_ref[0, :, pl.ds(r * w_out, w_out)] = (
            (lat + up) * fuse_scale).astype(o_ref.dtype)


# --------------------------- pallas_call wrappers ---------------------------

def _pick_spatial_tile(hw: int, max_tile: int = _MAX_LATERAL_TILE) -> int:
    if hw <= max_tile:
        return hw
    t = (max_tile // 128) * 128
    while t >= 128:
        if hw % t == 0:
            return t
        t -= 128
    return hw


def _pick_row_tile(h: int, w: int, max_rows: int = _MAX_FUSED_ROWS) -> int:
    if h <= max_rows:
        return h
    for cand in range(min(max_rows, h), 1, -1):
        if h % cand == 0 and cand % 2 == 0 and (cand * w) % 128 == 0:
            return cand
    return h


def _lateral_conv(x_flat, wt, b, compute_dtype):
    B, Cin, HW = x_flat.shape
    D = wt.shape[0]
    t_hw = _pick_spatial_tile(HW)
    kern = partial(_lateral_kernel, compute_dtype=compute_dtype)
    return pl.pallas_call(
        kern,
        out_shape=jax.ShapeDtypeStruct((B, D, HW), jnp.float32),
        grid=(B, HW // t_hw),
        in_specs=[
            pl.BlockSpec((1, Cin, t_hw), lambda bb, tt: (bb, 0, tt)),
            pl.BlockSpec((D, Cin), lambda bb, tt: (0, 0)),
            pl.BlockSpec((D, 1), lambda bb, tt: (0, 0)),
        ],
        out_specs=pl.BlockSpec((1, D, t_hw), lambda bb, tt: (bb, 0, tt)),
        compiler_params=pltpu.CompilerParams(
            dimension_semantics=("parallel", "parallel"),
            vmem_limit_bytes=_VMEM_LIMIT_BYTES),
    )(x_flat, wt, b)


def _lateral_conv_fused(x_flat, wt, b, prev, mwt, fuse_scale, compute_dtype,
                        H, W):
    B, Cin, HW = x_flat.shape
    D = wt.shape[0]
    _, _, Hp, Wp = prev.shape
    tile_h = _pick_row_tile(H, W)
    t_sz = tile_h * W
    kern = partial(_fused_kernel, compute_dtype=compute_dtype,
                   fuse_scale=fuse_scale, tile_h=tile_h, w_out=W, hp=Hp)
    return pl.pallas_call(
        kern,
        out_shape=jax.ShapeDtypeStruct((B, D, HW), jnp.float32),
        grid=(B, H // tile_h),
        in_specs=[
            pl.BlockSpec((1, Cin, t_sz), lambda bb, tt: (bb, 0, tt)),
            pl.BlockSpec((D, Cin), lambda bb, tt: (0, 0)),
            pl.BlockSpec((D, 1), lambda bb, tt: (0, 0)),
            pl.BlockSpec((1, D, Hp, Wp), lambda bb, tt: (bb, 0, 0, 0)),
            pl.BlockSpec((Wp, W), lambda bb, tt: (0, 0)),
        ],
        out_specs=pl.BlockSpec((1, D, t_sz), lambda bb, tt: (bb, 0, tt)),
        compiler_params=pltpu.CompilerParams(
            dimension_semantics=("parallel", "parallel"),
            vmem_limit_bytes=_VMEM_LIMIT_BYTES),
    )(x_flat, wt, b, prev, mwt)


# ------------------------------- glue / math --------------------------------

def _bilinear_x2_matrix_1d(n_in: int) -> np.ndarray:
    """(2*n_in, n_in) matrix reproducing F.interpolate(mode='bilinear',
    scale_factor=2, align_corners=False, antialias=False) along one axis."""
    n_out = 2 * n_in
    m = np.zeros((n_out, n_in), dtype=np.float32)
    scale = n_in / n_out
    for o in range(n_out):
        src = (o + 0.5) * scale - 0.5
        src = max(src, 0.0)
        i0 = min(int(np.floor(src)), n_in - 1)
        i1 = min(i0 + 1, n_in - 1)
        f = src - i0
        m[o, i0] += 1.0 - f
        m[o, i1] += f
    return m


def _position_encoding_sine(B, H, W, d_model, dtype, temperature=10000.0):
    # SAM2-style PositionEmbeddingSine (normalize=True).  Constant data that
    # depends only on the shape -> computed once per shape and cached by the
    # module (plain-JAX glue, output NCHW (B, d_model, H, W)).
    num_pos_feats = d_model // 2
    scale = 2.0 * math.pi
    eps = 1e-6
    y_embed = jnp.broadcast_to(
        jnp.arange(1, H + 1, dtype=jnp.float32)[None, :, None], (B, H, W)
    )
    x_embed = jnp.broadcast_to(
        jnp.arange(1, W + 1, dtype=jnp.float32)[None, None, :], (B, H, W)
    )
    y_embed = y_embed / (y_embed[:, -1:, :] + eps) * scale
    x_embed = x_embed / (x_embed[:, :, -1:] + eps) * scale
    dim_t = jnp.arange(num_pos_feats, dtype=jnp.float32)
    dim_t = temperature ** (2.0 * jnp.floor(dim_t / 2.0) / num_pos_feats)
    pos_x = x_embed[:, :, :, None] / dim_t
    pos_y = y_embed[:, :, :, None] / dim_t
    pos_x = jnp.stack(
        (jnp.sin(pos_x[:, :, :, 0::2]), jnp.cos(pos_x[:, :, :, 1::2])), axis=4
    ).reshape(B, H, W, num_pos_feats)
    pos_y = jnp.stack(
        (jnp.sin(pos_y[:, :, :, 0::2]), jnp.cos(pos_y[:, :, :, 1::2])), axis=4
    ).reshape(B, H, W, num_pos_feats)
    pos = jnp.concatenate((pos_y, pos_x), axis=3).transpose(0, 3, 1, 2)
    return pos.astype(dtype)


class FpnNeckPallas:
    def __init__(
        self,
        d_model: int,
        backbone_channel_list: List[int],
        kernel_size: int = 1,
        stride: int = 1,
        padding: int = 0,
        fpn_interp_model: str = "bilinear",
        fuse_type: str = "sum",
        fpn_top_down_levels: Optional[List[int]] = None,
        key=None,
    ):
        assert kernel_size == 1 and stride == 1 and padding == 0
        # TODO(synk): only the default 1x1 lateral conv is implemented (general KxK conv path omitted).
        assert fpn_interp_model == "bilinear"
        # TODO(synk): 'nearest' / 'bicubic' fpn_interp_model variants are not implemented.
        assert fuse_type in ("sum", "avg")
        assert d_model % 2 == 0
        self.d_model = d_model
        self.backbone_channel_list = list(backbone_channel_list)
        self.fuse_scale = 0.5 if fuse_type == "avg" else 1.0
        n_levels = len(backbone_channel_list)
        if fpn_top_down_levels is None:
            fpn_top_down_levels = range(n_levels)
        self.fpn_top_down_levels = list(fpn_top_down_levels)

        # Deterministic parameter init matching nn.Conv2d default bounds.
        if key is None:
            key = jax.random.PRNGKey(0)
        self.weights, self.biases = [], []   # wt: (D, Cin), b: (D, 1)
        for dim in self.backbone_channel_list:
            key, k1, k2 = jax.random.split(key, 3)
            bound = 1.0 / math.sqrt(dim)
            wt = jax.random.uniform(k1, (d_model, dim), jnp.float32, -bound, bound)
            b = jax.random.uniform(k2, (d_model, 1), jnp.float32, -bound, bound)
            self.weights.append(wt)
            self.biases.append(b)

        self._mwt_cache = {}   # Wp -> (Wp, 2*Wp) horizontal interp matrix (transposed)
        self._pos_cache = {}   # (B, H, W) -> position encoding (NCHW)

    def _get_mwt(self, wp: int):
        if wp not in self._mwt_cache:
            self._mwt_cache[wp] = jnp.asarray(_bilinear_x2_matrix_1d(wp).T)
        return self._mwt_cache[wp]

    def _get_pos(self, B, H, W):
        key = (B, H, W)
        if key not in self._pos_cache:
            self._pos_cache[key] = _position_encoding_sine(
                B, H, W, self.d_model, jnp.float32)
        return self._pos_cache[key]

    def __call__(self, xs: List[jnp.ndarray], compute_dtype=jnp.float32):
        n = len(self.backbone_channel_list) - 1
        assert len(xs) == n + 1
        out = [None] * (n + 1)
        pos = [None] * (n + 1)
        prev = None  # (B, D, Hp, Wp)
        for i in range(n, -1, -1):
            x = xs[i]  # NCHW
            B, Cin, H, W = x.shape
            ci = n - i
            wt, b = self.weights[ci], self.biases[ci]
            x_flat = x.reshape(B, Cin, H * W)  # free reshape, no transpose
            if i in self.fpn_top_down_levels and prev is not None:
                Hp, Wp = prev.shape[2], prev.shape[3]
                assert H == 2 * Hp and W == 2 * Wp, (
                    "only exact x2 level ratios are supported")
                mwt = self._get_mwt(Wp)
                o_flat = _lateral_conv_fused(
                    x_flat, wt, b, prev, mwt, self.fuse_scale, compute_dtype, H, W)
            else:
                o_flat = _lateral_conv(x_flat, wt, b, compute_dtype)
            x_out = o_flat.reshape(B, self.d_model, H, W)
            prev = x_out
            out[i] = x_out
            pos[i] = self._get_pos(B, H, W).astype(x_out.dtype)
        return out, pos

    # pure-JAX reference with the same math (used only for self-check)
    def reference(self, xs, compute_dtype=jnp.float32):
        n = len(self.backbone_channel_list) - 1
        out = [None] * (n + 1)
        prev = None
        for i in range(n, -1, -1):
            x = xs[i]
            B, Cin, H, W = x.shape
            ci = n - i
            wt, b = self.weights[ci], self.biases[ci]
            lat = jnp.einsum(
                "dc,bchw->bdhw",
                wt.astype(compute_dtype), x.astype(compute_dtype),
                preferred_element_type=jnp.float32,
            ) + b.reshape(1, self.d_model, 1, 1)
            if i in self.fpn_top_down_levels and prev is not None:
                Hp, Wp = prev.shape[2], prev.shape[3]
                Mh = jnp.asarray(_bilinear_x2_matrix_1d(Hp))        # (H, Hp)
                MwT = jnp.asarray(_bilinear_x2_matrix_1d(Wp).T)     # (Wp, W)
                tmp = jnp.einsum("hH,bdHw->bdhw", Mh, prev)         # f32 vertical
                up = jnp.einsum(
                    "bdhp,pw->bdhw",
                    tmp.astype(compute_dtype), MwT.astype(compute_dtype),
                    preferred_element_type=jnp.float32,
                )
                cur = (lat + up) * self.fuse_scale
            else:
                cur = lat
            prev = cur
            out[i] = cur
        return out


if __name__ == "__main__":
    key = jax.random.PRNGKey(0)
    d_model = 32
    # channel of xs[i] is backbone_channel_list[n - i] (matches the PyTorch module)
    backbone_channel_list = [64, 48, 32, 16]
    B = 2
    base = 2  # spatial size of the coarsest level xs[n]
    n = len(backbone_channel_list) - 1

    keys = jax.random.split(key, n + 2)
    xs = []
    for i in range(n + 1):
        Cin = backbone_channel_list[n - i]
        H = W = base * (2 ** (n - i))
        xs.append(jax.random.normal(keys[i], (B, Cin, H, W), dtype=jnp.float32))

    neck = FpnNeckPallas(d_model, backbone_channel_list, key=keys[-1])

    # f32 path (tight self-check against a pure-JAX reference of the same math)
    out, pos = neck(xs)
    for t in out + pos:
        jax.block_until_ready(t)
    ref_out = neck.reference(xs)
    for a, r in zip(out, ref_out):
        np.testing.assert_allclose(np.asarray(a), np.asarray(r),
                                   atol=2e-4, rtol=2e-4)

    # bf16 MXU-operand path (recommended on v6e/v7x), loose check vs bf16 reference
    out_bf, _ = neck(xs, compute_dtype=jnp.bfloat16)
    for t in out_bf:
        jax.block_until_ready(t)
    ref_bf = neck.reference(xs, compute_dtype=jnp.bfloat16)
    for a, r in zip(out_bf, ref_bf):
        np.testing.assert_allclose(np.asarray(a), np.asarray(r),
                                   atol=5e-2, rtol=5e-2)

    print("KERNEL_OK")
</pallas_src>

<mosaic_0001>
module attributes {stable_mosaic.version = 11 : i64} {
  func.func @_lateral_kernel(%arg0: i32, %arg1: i32, %arg2: memref<1x64x4xf32, #tpu.memory_space<vmem>>, %arg3: memref<32x64xf32, #tpu.memory_space<vmem>>, %arg4: memref<32x1xf32, #tpu.memory_space<vmem>>, %arg5: memref<1x32x4xf32, #tpu.memory_space<vmem>>) attributes {dimension_semantics = [#tpu.dimension_semantics<parallel>, #tpu.dimension_semantics<parallel>], iteration_bounds = array<i64: 2, 1>, scalar_prefetch = 0 : i64, scratch_operands = 0 : i64, tpu.core_type = #tpu.core_type<tc>, window_params = [{transform_indices = @transform_0, window_bounds = array<i64: 1, 64, 4>}, {pipeline_mode = #tpu.pipeline_mode<synchronous>, transform_indices = @transform_1, window_bounds = array<i64: 32, 64>}, {pipeline_mode = #tpu.pipeline_mode<synchronous>, transform_indices = @transform_2, window_bounds = array<i64: 32, 1>}, {transform_indices = @transform_3, window_bounds = array<i64: 1, 32, 4>}]} {
    %c0 = arith.constant 0 : index
    %c0_0 = arith.constant 0 : index
    %c0_1 = arith.constant 0 : index
    %0 = vector.load %arg2[%c0, %c0_0, %c0_1] : memref<1x64x4xf32, #tpu.memory_space<vmem>>, vector<1x64x4xf32>
    %1 = vector.shape_cast %0 : vector<1x64x4xf32> to vector<64x4xf32>
    %c0_2 = arith.constant 0 : index
    %c0_3 = arith.constant 0 : index
    %2 = vector.load %arg3[%c0_2, %c0_3] : memref<32x64xf32, #tpu.memory_space<vmem>>, vector<32x64xf32>
    %cst = arith.constant dense<0.000000e+00> : vector<32x4xf32>
    %3 = tpu.matmul %2, %1, %cst {dimension_numbers = #tpu.dot_dimension_numbers<[1], [0], [0], [1], [0, 0, 1, 1], [], []>} : vector<32x64xf32>, vector<64x4xf32>, vector<32x4xf32> -> vector<32x4xf32>
    %c0_4 = arith.constant 0 : index
    %c0_5 = arith.constant 0 : index
    %4 = vector.load %arg4[%c0_4, %c0_5] : memref<32x1xf32, #tpu.memory_space<vmem>>, vector<32x1xf32>
    %5 = vector.broadcast %4 : vector<32x1xf32> to vector<32x4xf32>
    %6 = arith.addf %3, %5 : vector<32x4xf32>
    %c0_6 = arith.constant 0 : index
    %c0_7 = arith.constant 0 : index
    %c0_8 = arith.constant 0 : index
    %7 = vector.load %arg5[%c0_6, %c0_7, %c0_8] : memref<1x32x4xf32, #tpu.memory_space<vmem>>, vector<1x32x4xf32>
    %8 = vector.shape_cast %7 : vector<1x32x4xf32> to vector<32x4xf32>
    %9 = vector.shape_cast %6 : vector<32x4xf32> to vector<1x32x4xf32>
    tpu.vector_store %arg5[%c0_6, %c0_7, %c0_8], %9 {strides = array<i32>} : memref<1x32x4xf32, #tpu.memory_space<vmem>>, vector<1x32x4xf32>,
    return
  }
  func.func @transform_0(%arg0: i32, %arg1: i32) -> (i32, i32, i32) {
    %c0_i32 = arith.constant 0 : i32
    %c0_i32_0 = arith.constant 0 : i32
    return %arg0, %c0_i32, %arg1 : i32, i32, i32
  }
  func.func @transform_1(%arg0: i32, %arg1: i32) -> (i32, i32) {
    %c0_i32 = arith.constant 0 : i32
    %c0_i32_0 = arith.constant 0 : i32
    %c0_i32_1 = arith.constant 0 : i32
    return %c0_i32, %c0_i32_0 : i32, i32
  }
  func.func @transform_2(%arg0: i32, %arg1: i32) -> (i32, i32) {
    %c0_i32 = arith.constant 0 : i32
    %c0_i32_0 = arith.constant 0 : i32
    %c0_i32_1 = arith.constant 0 : i32
    return %c0_i32, %c0_i32_0 : i32, i32
  }
  func.func @transform_3(%arg0: i32, %arg1: i32) -> (i32, i32, i32) {
    %c0_i32 = arith.constant 0 : i32
    %c0_i32_0 = arith.constant 0 : i32
    return %arg0, %c0_i32, %arg1 : i32, i32, i32
  }
}

</mosaic_0001>

<llo_original>
// kernel: tpu_custom_call.1
$region0: #{tpu_custom_call.1}
  #allocation0 [shape = 'u32[]', space=smem, size = 0x4, offset = 0x4, fixed_abs, tag = 'smem constant byte address 0x4 - core index']
  #allocation1 [shape = 'u32[144,128]{1,0:T(1,128)}', space=vmem, size = 0x12000, scoped, tag = 'internal scratch']
  %s0 = inlined_call_operand.vmem [shape: f32[2,64,4], index: 0, kind: input, shape index: {}]
  %s1 = inlined_call_operand.vmem [shape: f32[32,64], index: 1, kind: input, shape index: {}]
  %s2 = inlined_call_operand.vmem [shape: f32[32,1], index: 2, kind: input, shape index: {}]
  %s3 = inlined_call_operand.vmem [shape: f32[2,32,4], index: 3, kind: output, shape index: {}]
  %s4 = sld [smem:[#allocation0]]
  $region45: #{tpu_custom_call.1} parent=0
    _
  %s6 = ssub.s32 1, %s4
  %s7 = scalar_select 0, %s6, %s4
  loop: start=0, step=1, limit=4
  $region2: #{tpu_custom_call.1} parent=0 // loop_pre_header
    _
  $region3: #{tpu_custom_call.1} parent=0 // loop_header
    %s9 = sphi 0, %s13
    %p10 = scmp.ge.s32.totalorder %s9, 4
    %s16 = sphi 0, %s28
    %s17 = sphi 0, %s24
    %s18 = sphi 0, %s16
    %s19 = sphi 0, %s17
    %s20 = sphi 0, %s18
    %s21 = sphi 0, %s19
    %s33 = sphi 0, %s35
    %s36 = sphi 0, %s33
    %s37 = sphi 0, %s36
    %s53 = sphi 0, %s37
    %s57 = sphi 0, %s57
    %s59 = sphi 0, %s57
    %s60 = sphi 0, %s59
    %s74 = sphi 0, %s60
    %s78 = sphi 0, %s78
    %s80 = sphi 0, %s78
    %s81 = sphi 0, %s80
    %s95 = sphi 0, %s81
    %s103 = sphi 0, %s105
    %s106 = sphi 0, %s103
    %s107 = sphi 0, %s106
    %s123 = sphi 0, %s107
  $region4: #{tpu_custom_call.1} parent=0 // loop_header_branch
    %12 = sbr.rel (%p10) target = $region8
  $region5: #{tpu_custom_call.1} parent=0 // loop_body
    %s14 = ssub.s32 %s9, 1
    %s15 = ssub.s32 %s9, 2
    %s22 = sadd.s32 1, %s17
    %p23 = scmp.ge.s32.totalorder %s22, 1
    %s24 = scalar_select %p23, 0, %s22
    %s25 = sadd.s32 1, %s16
    %s26 = scalar_select %p23, %s25, %s16
    %p27 = scmp.ge.s32.totalorder %s26, 2
    %s28 = scalar_select %p27, 0, %s26
    %s29 = ssub.s32 %s16, %s28
    %s30 = ssub.s32 %s17, %s24
    %s31 = sor.u32 %s29, %s30
    %p32 = scmp.eq.s32.totalorder %s31, 0
    %s34 = sadd.s32 %s33, 1
    %s35 = scalar_select %p32, %s33, %s34
    %p38 = pneg %p32
    %p39 = scmp.eq.s32.totalorder %s9, 1
    %p40 = por %p38, %p39
    %p41 = scmp.ne.s32.totalorder %s33, %s36
    %p42 = scmp.eq.s32.totalorder %s9, 0
    %p43 = por %p41, %p42
    %p44 = scmp.ne.s32.totalorder %s33, %s36
    %p45 = scmp.eq.s32.totalorder %s14, 1
    %p46 = por %p44, %p45
    %p47 = scmp.ne.s32.totalorder %s36, %s37
    %p48 = scmp.eq.s32.totalorder %s14, 0
    %p49 = por %p47, %p48
    %p50 = scmp.ne.s32.totalorder %s36, %s37
    %p51 = scmp.eq.s32.totalorder %s15, 1
    %p52 = por %p50, %p51
    %p54 = scmp.ne.s32.totalorder %s37, %s53
    %p55 = scmp.eq.s32.totalorder %s15, 0
    %p56 = por %p54, %p55
    %s58 = sadd.s32 %s57, 1
    %p61 = scmp.eq.s32.totalorder %s9, 1
    %p62 = scmp.ne.s32.totalorder %s57, %s59
    %p63 = scmp.eq.s32.totalorder %s9, 0
    %p64 = por %p62, %p63
    %p65 = scmp.ne.s32.totalorder %s57, %s59
    %p66 = scmp.eq.s32.totalorder %s14, 1
    %p67 = por %p65, %p66
    %p68 = scmp.ne.s32.totalorder %s59, %s60
    %p69 = scmp.eq.s32.totalorder %s14, 0
    %p70 = por %p68, %p69
    %p71 = scmp.ne.s32.totalorder %s59, %s60
    %p72 = scmp.eq.s32.totalorder %s15, 1
    %p73 = por %p71, %p72
    %p75 = scmp.ne.s32.totalorder %s60, %s74
    %p76 = scmp.eq.s32.totalorder %s15, 0
    %p77 = por %p75, %p76
    %s79 = sadd.s32 %s78, 1
    %p82 = scmp.eq.s32.totalorder %s9, 1
    %p83 = scmp.ne.s32.totalorder %s78, %s80
    %p84 = scmp.eq.s32.totalorder %s9, 0
    %p85 = por %p83, %p84
    %p86 = scmp.ne.s32.totalorder %s78, %s80
    %p87 = scmp.eq.s32.totalorder %s14, 1
    %p88 = por %p86, %p87
    %p89 = scmp.ne.s32.totalorder %s80, %s81
    %p90 = scmp.eq.s32.totalorder %s14, 0
    %p91 = por %p89, %p90
    %p92 = scmp.ne.s32.totalorder %s80, %s81
    %p93 = scmp.eq.s32.totalorder %s15, 1
    %p94 = por %p92, %p93
    %p96 = scmp.ne.s32.totalorder %s81, %s95
    %p97 = scmp.eq.s32.totalorder %s15, 0
    %p98 = por %p96, %p97
    %s99 = ssub.s32 %s16, %s28
    %s100 = ssub.s32 %s17, %s24
    %s101 = sor.u32 %s99, %s100
    %p102 = scmp.eq.s32.totalorder %s101, 0
    %s104 = sadd.s32 %s103, 1
    %s105 = scalar_select %p102, %s103, %s104
    %p108 = pneg %p102
    %p109 = scmp.eq.s32.totalorder %s9, 1
    %p110 = por %p108, %p109
    %p111 = scmp.ne.s32.totalorder %s103, %s106
    %p112 = scmp.eq.s32.totalorder %s9, 0
    %p113 = por %p111, %p112
    %p114 = scmp.ne.s32.totalorder %s103, %s106
    %p115 = scmp.eq.s32.totalorder %s14, 1
    %p116 = por %p114, %p115
    %p117 = scmp.ne.s32.totalorder %s106, %s107
    %p118 = scmp.eq.s32.totalorder %s14, 0
    %p119 = por %p117, %p118
    %p120 = scmp.ne.s32.totalorder %s106, %s107
    %p121 = scmp.eq.s32.totalorder %s15, 1
    %p122 = por %p120, %p121
    %p124 = scmp.ne.s32.totalorder %s107, %s123
    %p125 = scmp.eq.s32.totalorder %s15, 0
    %p126 = por %p124, %p125
    %p127 = scmp.le.s32.totalorder 1, %s9
    %p128 = scmp.lt.s32.totalorder %s9, 3
    %p129 = pnand %p127, %p128
    %p130 = pneg %p129
    // Predicated region
    $region9: #{tpu_custom_call.1} parent=5 // pred_check
      _
    $region10: #{tpu_custom_call.1} parent=5 // pred_check_branch
      %132 = sbr.rel (%p129) target = $region12
    $region11: #{tpu_custom_call.1} parent=5 // pred_region
      %s133 = ssub.s32 %s9, 1
      // Predicated region
      $region13: #{tpu_custom_call.1} parent=11 // pred_check
        %p134 = pneg %p70
      $region14: #{tpu_custom_call.1} parent=11 // pred_check_branch
        %136 = sbr.rel (%p134) target = $region16
      $region15: #{tpu_custom_call.1} parent=11 // pred_region
        _
      $region16: #{tpu_custom_call.1} parent=11 // pred_fallthru
        _
      // Predicated region
      $region17: #{tpu_custom_call.1} parent=11 // pred_check
        %p137 = pneg %p91
      $region18: #{tpu_custom_call.1} parent=11 // pred_check_branch
        %139 = sbr.rel (%p137) target = $region20
      $region19: #{tpu_custom_call.1} parent=11 // pred_region
        _
      $region20: #{tpu_custom_call.1} parent=11 // pred_fallthru
        _
    $region12: #{tpu_custom_call.1} parent=5 // pred_fallthru
      _
    %p140 = scmp.lt.s32.totalorder %s9, 2
    // Predicated region
    $region21: #{tpu_custom_call.1} parent=5 // pred_check
      %p141 = pneg %p140
    $region22: #{tpu_custom_call.1} parent=5 // pred_check_branch
      %143 = sbr.rel (%p141) target = $region24
    $region23: #{tpu_custom_call.1} parent=5 // pred_region
      // Predicated region
      $region25: #{tpu_custom_call.1} parent=23 // pred_check
        %p144 = pneg %p43
      $region26: #{tpu_custom_call.1} parent=23 // pred_check_branch
        %146 = sbr.rel (%p144) target = $region28
      $region27: #{tpu_custom_call.1} parent=23 // pred_region
        %p147 = scmp.lt.s32.totalorder %s16, 1
        %s148 = scalar_select %p147, %s16, 1
        %p149 = scmp.lt.s32.totalorder %s17, 0
        %s150 = scalar_select %p149, %s17, 0
        %s151 = smul.addr %s148, 8
        %s152 = sadd.s32 %s150, %s151
        %s153 = smul.addr %s152, 8
        %s154 = scalar_lea.vmem %s0, %s153
      $region28: #{tpu_custom_call.1} parent=23 // pred_fallthru
        _
    $region24: #{tpu_custom_call.1} parent=5 // pred_fallthru
      _
    %p155 = scmp.le.s32.totalorder 1, %s9
    %p156 = scmp.lt.s32.totalorder %s9, 3
    %p157 = pnand %p155, %p156
    %p158 = pneg %p157
    // Predicated region
    $region29: #{tpu_custom_call.1} parent=5 // pred_check
      _
    $region30: #{tpu_custom_call.1} parent=5 // pred_check_branch
      %160 = sbr.rel (%p157) target = $region32
    $region31: #{tpu_custom_call.1} parent=5 // pred_region
      %s161 = ssub.s32 %s9, 1
      %p162 = scmp.lt.s32.totalorder %s18, 1
      %s163 = scalar_select %p162, %s18, 1
      %p164 = scmp.lt.s32.totalorder %s19, 0
      %s165 = scalar_select %p164, %s19, 0
      %s166 = smul.addr %s163, 8
      %s167 = sadd.s32 %s165, %s166
      %s168 = smul.addr %s167, 8
      %s169 = scalar_lea.vmem %s0, %s168
      %p170 = pneg %p49
      %p171 = pneg %p46
      %p172 = pneg %p70
      %p173 = pneg %p67
      %p174 = pneg %p91
      %p175 = pneg %p88
      %p176 = pneg %p119
      %p177 = pneg %p116
      %p178 = scmp.lt.s32.totalorder %s18, 1
      %s179 = scalar_select %p178, %s18, 1
      %p180 = scmp.lt.s32.totalorder %s19, 0
      %s181 = scalar_select %p180, %s19, 0
      %s182 = smul.addr %s179, 4
      %s183 = sadd.s32 %s181, %s182
      %s184 = smul.addr %s183, 8
      %s185 = scalar_lea.vmem %s3, %s184
      %p186 = scmp.lt.s32.totalorder %s18, 1
      %s187 = scalar_select %p186, %s18, 1
      %p188 = scmp.lt.s32.totalorder %s19, 0
      %s189 = scalar_select %p188, %s19, 0
      %s190 = smul.addr %s187, 8
      %s191 = sadd.s32 %s189, %s190
      %s192 = smul.addr %s191, 8
      %s193 = scalar_lea.vmem %s0, %s192
      %p194 = scmp.lt.s32.totalorder %s18, 1
      %s195 = scalar_select %p194, %s18, 1
      %p196 = scmp.lt.s32.totalorder %s19, 0
      %s197 = scalar_select %p196, %s19, 0
      %s198 = smul.addr %s195, 4
      %s199 = sadd.s32 %s197, %s198
      %s200 = smul.addr %s199, 8
      %s201 = scalar_lea.vmem %s3, %s200
      %v202 = vld [vmem:[%s193] sm:$0xff]
      %v203 = vld [vmem:[%s193 + $0x8] sm:$0xff]
      %v204 = vld [vmem:[%s193 + $0x10] sm:$0xff]
      %v205 = vld [vmem:[%s193 + $0x18] sm:$0xff]
      %v206 = vld [vmem:[%s193 + $0x20] sm:$0xff]
      %v207 = vld [vmem:[%s193 + $0x28] sm:$0xff]
      %v208 = vld [vmem:[%s193 + $0x30] sm:$0xff]
      %v209 = vld [vmem:[%s193 + $0x38] sm:$0xff]
      %v210 = vld [vmem:[%s1] sm:$0xff]
      %v211 = vld [vmem:[%s1 + $0x8] sm:$0xff]
      %v212 = vld [vmem:[%s1 + $0x10] sm:$0xff]
      %v213 = vld [vmem:[%s1 + $0x18] sm:$0xff]
      %v214 = vld [vmem:[%s2] sm:$0xff]
      %v215 = vld [vmem:[%s2 + $0x8] sm:$0xff]
      %v216 = vld [vmem:[%s2 + $0x10] sm:$0xff]
      %v217 = vld [vmem:[%s2 + $0x18] sm:$0xff]
      %219 = vset.pattern.permute.xlu0 0
      %220 = vperm.xlu0 %219, %v214
      %v221 = vpop.permute.xlu0 %220
      %224 = vset.pattern.permute.xlu0 0
      %225 = vperm.xlu0 %224, %v215
      %v226 = vpop.permute.xlu0 %225
      %229 = vset.pattern.permute.xlu0 0
      %230 = vperm.xlu0 %229, %v216
      %v231 = vpop.permute.xlu0 %230
      %234 = vset.pattern.permute.xlu0 0
      %235 = vperm.xlu0 %234, %v217
      %v236 = vpop.permute.xlu0 %235
      %vm238 = vcmask 523264
      %v240 = vsel %vm238, %v210, 0
      %v243 = vsel %vm238, %v211, 0
      %v246 = vsel %vm238, %v212, 0
      %v249 = vsel %vm238, %v213, 0
      %251 = vmatprep.subr.mxu0 0.0
      %252 = vmatpush1.msra.mxu0 0.0
      %253 = vmatprep.subr.mxu0 0.0
      %254 = vmatpush1.msra.mxu0 0.0
      %255 = vmatprep.subr.mxu0 0.0
      %256 = vmatpush1.msra.mxu0 0.0
      %257 = vmatprep.subr.mxu0 0.0
      %258 = vmatpush1.msra.mxu0 0.0
      %259 = vmatprep.subr.mxu0 0.0
      %260 = vmatpush1.msra.mxu0 0.0
      %261 = vmatprep.subr.mxu0 0.0
      %262 = vmatpush1.msra.mxu0 0.0
      %263 = vmatprep.subr.mxu0 0.0
      %264 = vmatpush1.msra.mxu0 0.0
      %265 = vmatprep.subr.mxu0 0.0
      %266 = vmatpush1.msra.mxu0 0.0
      %267 = vmatprep.subr.mxu0 0.0
      %268 = vmatpush1.msra.mxu0 %v209
      %269 = vmatprep.subr.mxu0 0.0
      %270 = vmatpush1.msra.mxu0 %v208
      %271 = vmatprep.subr.mxu0 0.0
      %272 = vmatpush1.msra.mxu0 %v207
      %273 = vmatprep.subr.mxu0 0.0
      %274 = vmatpush1.msra.mxu0 %v206
      %275 = vmatprep.subr.mxu0 0.0
      %276 = vmatpush1.msra.mxu0 %v205
      %277 = vmatprep.subr.mxu0 0.0
      %278 = vmatpush1.msra.mxu0 %v204
      %279 = vmatprep.subr.mxu0 0.0
      %280 = vmatpush1.msra.mxu0 %v203
      %281 = vmatprep.subr.mxu0 0.0
      %282 = vmatpush1.msra.mxu0 %v202
      %283 = vmatprep.subr.mxu0 0.0
      %284 = vmatpush2.msra.mxu0 0.0
      %285 = vmatprep.subr.mxu0 0.0
      %286 = vmatpush2.msra.mxu0 0.0
      %287 = vmatprep.subr.mxu0 0.0
      %288 = vmatpush2.msra.mxu0 0.0
      %289 = vmatprep.subr.mxu0 0.0
      %290 = vmatpush2.msra.mxu0 0.0
      %291 = vmatprep.subr.mxu0 0.0
      %292 = vmatpush2.msra.mxu0 0.0
      %293 = vmatprep.subr.mxu0 0.0
      %294 = vmatpush2.msra.mxu0 0.0
      %295 = vmatprep.subr.mxu0 0.0
      %296 = vmatpush2.msra.mxu0 0.0
      %297 = vmatprep.subr.mxu0 0.0
      %298 = vmatpush2.msra.mxu0 0.0
      %299 = vmatprep.subr.mxu0 0.0
      %300 = vmatpush2.msra.mxu0 0.0
      %301 = vmatprep.subr.mxu0 0.0
      %302 = vmatpush2.msra.mxu0 0.0
      %303 = vmatprep.subr.mxu0 0.0
      %304 = vmatpush2.msra.mxu0 0.0
      %305 = vmatprep.subr.mxu0 0.0
      %306 = vmatpush2.msra.mxu0 0.0
      %307 = vmatprep.subr.mxu0 0.0
      %308 = vmatpush2.msra.mxu0 0.0
      %309 = vmatprep.subr.mxu0 0.0
      %310 = vmatpush2.msra.mxu0 0.0
      %311 = vmatprep.subr.mxu0 0.0
      %312 = vmatpush2.msra.mxu0 0.0
      %313 = vmatprep.subr.mxu0 0.0
      %314 = vmatpush2.msra.mxu0 0.0
      %315 = vmatprep.mubr.f32.mxu0 0.0
      %316 = vmatmul.mubr.f32.gmra.mxu0 %v240
      %v317 = vpop.f32.mrf.mxu0
      %v318 = vadd.f32 %v221, %v317
      %v319 = vpop.f32.mrf.mxu0
      %320 = vmatprep.mubr.f32.mxu0 0.0
      %321 = vmatmul.mubr.f32.gmra.mxu0 %v243
      %v322 = vpop.f32.mrf.mxu0
      %v323 = vadd.f32 %v226, %v322
      %v324 = vpop.f32.mrf.mxu0
      %325 = vmatprep.mubr.f32.mxu0 0.0
      %326 = vmatmul.mubr.f32.gmra.mxu0 %v246
      %v327 = vpop.f32.mrf.mxu0
      %v328 = vadd.f32 %v231, %v327
      %v329 = vpop.f32.mrf.mxu0
      %330 = vmatprep.mubr.f32.mxu0 0.0
      %331 = vmatmul.mubr.f32.gmra.mxu0 %v249
      %v332 = vpop.f32.mrf.mxu0
      %v333 = vadd.f32 %v236, %v332
      %v334 = vpop.f32.mrf.mxu0
      %335 = vdwg.mxu0
      %vm336 = vcmask 31744
      %337 = vst.msk [vmem:[%s201] sm:$0xff] %vm336, %v318
      %338 = vst.msk [vmem:[%s201 + $0x8] sm:$0xff] %vm336, %v323
      %339 = vst.msk [vmem:[%s201 + $0x10] sm:$0xff] %vm336, %v328
      %340 = vst.msk [vmem:[%s201 + $0x18] sm:$0xff] %vm336, %v333
      %p341 = scmp.lt.s32.totalorder %s18, 1
      %s342 = scalar_select %p341, %s18, 1
      %p343 = scmp.lt.s32.totalorder %s19, 0
      %s344 = scalar_select %p343, %s19, 0
      %s345 = smul.addr %s342, 4
      %s346 = sadd.s32 %s344, %s345
      %s347 = smul.addr %s346, 8
      %s348 = scalar_lea.vmem %s3, %s347
      // Predicated region
      $region33: #{tpu_custom_call.1} parent=31 // pred_check
        %p349 = pneg %p116
      $region34: #{tpu_custom_call.1} parent=31 // pred_check_branch
        %351 = sbr.rel (%p349) target = $region36
      $region35: #{tpu_custom_call.1} parent=31 // pred_region
        _
      $region36: #{tpu_custom_call.1} parent=31 // pred_fallthru
        _
    $region32: #{tpu_custom_call.1} parent=5 // pred_fallthru
      _
    %p352 = scmp.le.s32.totalorder 2, %s9
    // Predicated region
    $region37: #{tpu_custom_call.1} parent=5 // pred_check
      %p353 = pneg %p352
    $region38: #{tpu_custom_call.1} parent=5 // pred_check_branch
      %355 = sbr.rel (%p353) target = $region40
    $region39: #{tpu_custom_call.1} parent=5 // pred_region
      %s356 = ssub.s32 %s9, 2
      // Predicated region
      $region41: #{tpu_custom_call.1} parent=39 // pred_check
        %p357 = pneg %p122
      $region42: #{tpu_custom_call.1} parent=39 // pred_check_branch
        %359 = sbr.rel (%p357) target = $region44
      $region43: #{tpu_custom_call.1} parent=39 // pred_region
        %p360 = scmp.lt.s32.totalorder %s20, 1
        %s361 = scalar_select %p360, %s20, 1
        %p362 = scmp.lt.s32.totalorder %s21, 0
        %s363 = scalar_select %p362, %s21, 0
        %s364 = smul.addr %s361, 4
        %s365 = sadd.s32 %s363, %s364
        %s366 = smul.addr %s365, 8
        %s367 = scalar_lea.vmem %s3, %s366
      $region44: #{tpu_custom_call.1} parent=39 // pred_fallthru
        _
    $region40: #{tpu_custom_call.1} parent=5 // pred_fallthru
      _
  $region6: #{tpu_custom_call.1} parent=0 // loop_footer
    %s13 = sadd.s32 1, %s9
  $region7: #{tpu_custom_call.1} parent=0 // loop_footer_branch
    %8 = sbr.rel target = $region3
  $region8: #{tpu_custom_call.1} parent=0 // loop_exit
    _

</llo_original>
